<compile_context>
chip_gen: v5e
topology: v5e:2x2
jax: 0.10.0
libtpu: 0.0.40
codegen_flags: <defaults>
</compile_context>

<pallas_src>
import functools

import jax
import jax.numpy as jnp
import numpy as np
from jax.experimental import pallas as pl
from jax.experimental.pallas import tpu as pltpu


def _round_up(a: int, b: int) -> int:
    return ((a + b - 1) // b) * b


def _forgetmult_kernel(f_ref, x_ref, h0_ref, o_ref, prev_ref, *, time_block):
    # f_ref, x_ref, o_ref : (TT, FT) block   (time x features, lane-dense)
    # h0_ref              : (1, FT)  initial hidden for this feature tile
    # prev_ref            : (1, FT)  f32 VMEM scratch, persists across time blocks
    t_blk = pl.program_id(1)  # time-block index (grid axis 1, "arbitrary")

    # (Re-)initialize the carry at the start of each feature tile's time sweep.
    @pl.when(t_blk == 0)
    def _():
        prev_ref[...] = h0_ref[...].astype(jnp.float32)

    f = f_ref[...].astype(jnp.float32)   # (TT, FT)
    x = x_ref[...].astype(jnp.float32)   # (TT, FT)
    h = prev_ref[...]                    # (1, FT), f32 carry in vregs

    rows = []
    for tt in range(time_block):         # static, fully unrolled
        ft = f[tt:tt + 1, :]             # (1, FT) static row slice
        xt = x[tt:tt + 1, :]
        # h_t = f_t*x_t + (1-f_t)*h_{t-1}  ==  h_{t-1} + f_t*(x_t - h_{t-1})
        h = h + ft * (xt - h)
        rows.append(h)

    # Single full-tile (unmasked, lane-dense) store of all TT rows.
    o_ref[...] = jnp.concatenate(rows, axis=0).astype(o_ref.dtype)
    # Carry written back to VMEM scratch once per block.
    prev_ref[...] = h


def forget_mult(f, x, hidden_init=None, *, time_block=32, feat_block=1024):
    """Pallas implementation of CPUForgetMult.forward.

    f, x: (T, B, H) arrays. hidden_init: (B, H) or None. Returns (T, B, H).
    """
    T, B, H = f.shape
    dtype = f.dtype
    F = B * H

    if hidden_init is None:
        # h = f*x + (1-f)*0 is identical to the "no prev_h" first step.
        hidden_init = jnp.zeros((B, H), dtype=dtype)

    # Lane-dense 2-D layout: time -> sublanes, features -> lanes.
    f2 = f.reshape(T, F)
    x2 = x.reshape(T, F)
    h0 = hidden_init.reshape(1, F).astype(dtype)

    # Feature tile: multiple of 128 lanes.
    FT = min(feat_block, _round_up(F, 128))
    F_pad = _round_up(F, FT)
    # Time block: multiple of 8 sublanes, TT timesteps per grid step.
    TT = min(time_block, _round_up(T, 8))
    T_pad = _round_up(T, TT)

    # Zero padding is semantically safe: padded lanes have f=0, x=0, h0=0 so
    # h stays 0; padded time rows have f=0 so h carries through (sliced off).
    if F_pad != F:
        f2 = jnp.pad(f2, ((0, 0), (0, F_pad - F)))
        x2 = jnp.pad(x2, ((0, 0), (0, F_pad - F)))
        h0 = jnp.pad(h0, ((0, 0), (0, F_pad - F)))
    if T_pad != T:
        f2 = jnp.pad(f2, ((0, T_pad - T), (0, 0)))
        x2 = jnp.pad(x2, ((0, T_pad - T), (0, 0)))

    grid = (F_pad // FT, T_pad // TT)  # (parallel feature tiles, sequential time)

    out = pl.pallas_call(
        functools.partial(_forgetmult_kernel, time_block=TT),
        out_shape=jax.ShapeDtypeStruct((T_pad, F_pad), dtype),
        grid_spec=pltpu.PrefetchScalarGridSpec(
            num_scalar_prefetch=0,
            grid=grid,
            in_specs=[
                pl.BlockSpec((TT, FT), lambda j, t: (t, j)),   # f block
                pl.BlockSpec((TT, FT), lambda j, t: (t, j)),   # x block
                pl.BlockSpec((1, FT), lambda j, t: (0, j)),    # hidden_init tile
            ],
            out_specs=pl.BlockSpec((TT, FT), lambda j, t: (t, j)),
            scratch_shapes=[pltpu.VMEM((1, FT), jnp.float32)],  # running h (f32)
        ),
        compiler_params=pltpu.CompilerParams(
            # Feature tiles are independent -> megacore-shardable on v7x;
            # the recurrence axis stays sequential ("arbitrary", last).
            dimension_semantics=("parallel", "arbitrary"),
        ),
    )(f2, x2, h0)

    return out[:T, :F].reshape(T, B, H)


def _reference(f, x, hidden_init=None):
    # Pure-JAX reference (mirrors the PyTorch loop).
    T, B, H = f.shape
    prev = jnp.zeros((B, H), f.dtype) if hidden_init is None else hidden_init

    def step(prev_h, inputs):
        ft, xt = inputs
        h = ft * xt + (1.0 - ft) * prev_h
        return h, h

    _, hs = jax.lax.scan(step, prev, (f, x))
    return hs


if __name__ == "__main__":
    key = jax.random.PRNGKey(0)
    kf, kx, kh = jax.random.split(key, 3)

    # Case 1: small QRNN-like shape, hidden_init provided.
    T, B, H = 8, 4, 32
    f = jax.nn.sigmoid(jax.random.normal(kf, (T, B, H), dtype=jnp.float32))
    x = jax.random.normal(kx, (T, B, H), dtype=jnp.float32)
    h0 = jax.random.normal(kh, (B, H), dtype=jnp.float32)

    out = jax.block_until_ready(forget_mult(f, x, h0))
    ref = _reference(f, x, h0)
    np.testing.assert_allclose(np.asarray(out), np.asarray(ref), rtol=1e-5, atol=1e-5)

    # Case 2: hidden_init=None.
    out2 = jax.block_until_ready(forget_mult(f, x, None))
    ref2 = _reference(f, x, None)
    np.testing.assert_allclose(np.asarray(out2), np.asarray(ref2), rtol=1e-5, atol=1e-5)

    # Case 3: non-aligned T/F, multiple feature tiles and time blocks
    # (exercises padding and both grid axes; feat_block shrunk to force tiling).
    T3, B3, H3 = 40, 2, 192
    kf3, kx3, kh3 = jax.random.split(jax.random.PRNGKey(1), 3)
    f3 = jax.nn.sigmoid(jax.random.normal(kf3, (T3, B3, H3), dtype=jnp.float32))
    x3 = jax.random.normal(kx3, (T3, B3, H3), dtype=jnp.float32)
    h03 = jax.random.normal(kh3, (B3, H3), dtype=jnp.float32)

    out3 = jax.block_until_ready(
        forget_mult(f3, x3, h03, time_block=32, feat_block=128))
    ref3 = _reference(f3, x3, h03)
    np.testing.assert_allclose(np.asarray(out3), np.asarray(ref3), rtol=1e-5, atol=1e-5)

    print("KERNEL_OK")
</pallas_src>

<mosaic_0001>
module attributes {stable_mosaic.version = 11 : i64} {
  func.func @_forgetmult_kernel(%arg0: i32, %arg1: i32, %arg2: memref<8x128xf32, #tpu.memory_space<vmem>>, %arg3: memref<8x128xf32, #tpu.memory_space<vmem>>, %arg4: memref<1x128xf32, #tpu.memory_space<vmem>>, %arg5: memref<8x128xf32, #tpu.memory_space<vmem>>, %arg6: memref<1x128xf32, #tpu.memory_space<vmem>>) attributes {dimension_semantics = [#tpu.dimension_semantics<parallel>, #tpu.dimension_semantics<arbitrary>], iteration_bounds = array<i64: 1, 1>, scalar_prefetch = 0 : i64, scratch_operands = 1 : i64, tpu.core_type = #tpu.core_type<tc>, window_params = [{transform_indices = @transform_0, window_bounds = array<i64: 8, 128>}, {transform_indices = @transform_1, window_bounds = array<i64: 8, 128>}, {transform_indices = @transform_2, window_bounds = array<i64: 1, 128>}, {transform_indices = @transform_3, window_bounds = array<i64: 8, 128>}]} {
    %c0_i32 = arith.constant 0 : i32
    %0 = arith.cmpi eq, %arg1, %c0_i32 : i32
    %1 = arith.extui %0 : i1 to i32
    %c0_i32_0 = arith.constant 0 : i32
    %2 = arith.cmpi ne, %1, %c0_i32_0 : i32
    scf.if %2 {
      %c0_10 = arith.constant 0 : index
      %c0_11 = arith.constant 0 : index
      %49 = vector.load %arg4[%c0_10, %c0_11] : memref<1x128xf32, #tpu.memory_space<vmem>>, vector<1x128xf32>
      %c0_12 = arith.constant 0 : index
      %c0_13 = arith.constant 0 : index
      %50 = vector.load %arg6[%c0_12, %c0_13] : memref<1x128xf32, #tpu.memory_space<vmem>>, vector<1x128xf32>
      tpu.vector_store %arg6[%c0_12, %c0_13], %49 {strides = array<i32>} : memref<1x128xf32, #tpu.memory_space<vmem>>, vector<1x128xf32>,
    } else {
    }
    %c0 = arith.constant 0 : index
    %c0_1 = arith.constant 0 : index
    %3 = vector.load %arg2[%c0, %c0_1] : memref<8x128xf32, #tpu.memory_space<vmem>>, vector<8x128xf32>
    %c0_2 = arith.constant 0 : index
    %c0_3 = arith.constant 0 : index
    %4 = vector.load %arg3[%c0_2, %c0_3] : memref<8x128xf32, #tpu.memory_space<vmem>>, vector<8x128xf32>
    %c0_4 = arith.constant 0 : index
    %c0_5 = arith.constant 0 : index
    %5 = vector.load %arg6[%c0_4, %c0_5] : memref<1x128xf32, #tpu.memory_space<vmem>>, vector<1x128xf32>
    %6 = vector.extract_strided_slice %3 {offsets = [0, 0], sizes = [1, 128], strides = [1, 1]} : vector<8x128xf32> to vector<1x128xf32>
    %7 = vector.extract_strided_slice %4 {offsets = [0, 0], sizes = [1, 128], strides = [1, 1]} : vector<8x128xf32> to vector<1x128xf32>
    %8 = arith.subf %7, %5 : vector<1x128xf32>
    %9 = arith.mulf %6, %8 : vector<1x128xf32>
    %10 = arith.addf %5, %9 : vector<1x128xf32>
    %11 = vector.extract_strided_slice %3 {offsets = [1, 0], sizes = [1, 128], strides = [1, 1]} : vector<8x128xf32> to vector<1x128xf32>
    %12 = vector.extract_strided_slice %4 {offsets = [1, 0], sizes = [1, 128], strides = [1, 1]} : vector<8x128xf32> to vector<1x128xf32>
    %13 = arith.subf %12, %10 : vector<1x128xf32>
    %14 = arith.mulf %11, %13 : vector<1x128xf32>
    %15 = arith.addf %10, %14 : vector<1x128xf32>
    %16 = vector.extract_strided_slice %3 {offsets = [2, 0], sizes = [1, 128], strides = [1, 1]} : vector<8x128xf32> to vector<1x128xf32>
    %17 = vector.extract_strided_slice %4 {offsets = [2, 0], sizes = [1, 128], strides = [1, 1]} : vector<8x128xf32> to vector<1x128xf32>
    %18 = arith.subf %17, %15 : vector<1x128xf32>
    %19 = arith.mulf %16, %18 : vector<1x128xf32>
    %20 = arith.addf %15, %19 : vector<1x128xf32>
    %21 = vector.extract_strided_slice %3 {offsets = [3, 0], sizes = [1, 128], strides = [1, 1]} : vector<8x128xf32> to vector<1x128xf32>
    %22 = vector.extract_strided_slice %4 {offsets = [3, 0], sizes = [1, 128], strides = [1, 1]} : vector<8x128xf32> to vector<1x128xf32>
    %23 = arith.subf %22, %20 : vector<1x128xf32>
    %24 = arith.mulf %21, %23 : vector<1x128xf32>
    %25 = arith.addf %20, %24 : vector<1x128xf32>
    %26 = vector.extract_strided_slice %3 {offsets = [4, 0], sizes = [1, 128], strides = [1, 1]} : vector<8x128xf32> to vector<1x128xf32>
    %27 = vector.extract_strided_slice %4 {offsets = [4, 0], sizes = [1, 128], strides = [1, 1]} : vector<8x128xf32> to vector<1x128xf32>
    %28 = arith.subf %27, %25 : vector<1x128xf32>
    %29 = arith.mulf %26, %28 : vector<1x128xf32>
    %30 = arith.addf %25, %29 : vector<1x128xf32>
    %31 = vector.extract_strided_slice %3 {offsets = [5, 0], sizes = [1, 128], strides = [1, 1]} : vector<8x128xf32> to vector<1x128xf32>
    %32 = vector.extract_strided_slice %4 {offsets = [5, 0], sizes = [1, 128], strides = [1, 1]} : vector<8x128xf32> to vector<1x128xf32>
    %33 = arith.subf %32, %30 : vector<1x128xf32>
    %34 = arith.mulf %31, %33 : vector<1x128xf32>
    %35 = arith.addf %30, %34 : vector<1x128xf32>
    %36 = vector.extract_strided_slice %3 {offsets = [6, 0], sizes = [1, 128], strides = [1, 1]} : vector<8x128xf32> to vector<1x128xf32>
    %37 = vector.extract_strided_slice %4 {offsets = [6, 0], sizes = [1, 128], strides = [1, 1]} : vector<8x128xf32> to vector<1x128xf32>
    %38 = arith.subf %37, %35 : vector<1x128xf32>
    %39 = arith.mulf %36, %38 : vector<1x128xf32>
    %40 = arith.addf %35, %39 : vector<1x128xf32>
    %41 = vector.extract_strided_slice %3 {offsets = [7, 0], sizes = [1, 128], strides = [1, 1]} : vector<8x128xf32> to vector<1x128xf32>
    %42 = vector.extract_strided_slice %4 {offsets = [7, 0], sizes = [1, 128], strides = [1, 1]} : vector<8x128xf32> to vector<1x128xf32>
    %43 = arith.subf %42, %40 : vector<1x128xf32>
    %44 = arith.mulf %41, %43 : vector<1x128xf32>
    %45 = arith.addf %40, %44 : vector<1x128xf32>
    %46 = tpu.concatenate %10, %15, %20, %25, %30, %35, %40, %45 in 0 : vector<1x128xf32>, vector<1x128xf32>, vector<1x128xf32>, vector<1x128xf32>, vector<1x128xf32>, vector<1x128xf32>, vector<1x128xf32>, vector<1x128xf32> -> vector<8x128xf32>
    %c0_6 = arith.constant 0 : index
    %c0_7 = arith.constant 0 : index
    %47 = vector.load %arg5[%c0_6, %c0_7] : memref<8x128xf32, #tpu.memory_space<vmem>>, vector<8x128xf32>
    tpu.vector_store %arg5[%c0_6, %c0_7], %46 {strides = array<i32>} : memref<8x128xf32, #tpu.memory_space<vmem>>, vector<8x128xf32>,
    %c0_8 = arith.constant 0 : index
    %c0_9 = arith.constant 0 : index
    %48 = vector.load %arg6[%c0_8, %c0_9] : memref<1x128xf32, #tpu.memory_space<vmem>>, vector<1x128xf32>
    tpu.vector_store %arg6[%c0_8, %c0_9], %45 {strides = array<i32>} : memref<1x128xf32, #tpu.memory_space<vmem>>, vector<1x128xf32>,
    return
  }
  func.func @transform_0(%arg0: i32, %arg1: i32) -> (i32, i32) {
    %c0_i32 = arith.constant 0 : i32
    return %arg1, %arg0 : i32, i32
  }
  func.func @transform_1(%arg0: i32, %arg1: i32) -> (i32, i32) {
    %c0_i32 = arith.constant 0 : i32
    return %arg1, %arg0 : i32, i32
  }
  func.func @transform_2(%arg0: i32, %arg1: i32) -> (i32, i32) {
    %c0_i32 = arith.constant 0 : i32
    %c0_i32_0 = arith.constant 0 : i32
    return %c0_i32, %arg0 : i32, i32
  }
  func.func @transform_3(%arg0: i32, %arg1: i32) -> (i32, i32) {
    %c0_i32 = arith.constant 0 : i32
    return %arg1, %arg0 : i32, i32
  }
}

</mosaic_0001>

<llo_original>
// kernel: tpu_custom_call.1
$region0: #{tpu_custom_call.1}
  #allocation0 [shape = 'u32[]', space=smem, size = 0x4, offset = 0x4, fixed_abs, tag = 'smem constant byte address 0x4 - core index']
  #allocation1 [shape = 'u32[72,128]{1,0:T(1,128)}', space=vmem, size = 0x9000, scoped, tag = 'internal scratch']
  #allocation2 [shape = 'f32[1,128]{1,0:T(1,128)}', space=vmem, size = 0x200, scoped, tag = 'scratch operand']
  %s0 = inlined_call_operand.hbm [shape: f32[8,128], index: 0, kind: input, shape index: {}]
  %s1 = inlined_call_operand.hbm [shape: f32[8,128], index: 1, kind: input, shape index: {}]
  %s2 = inlined_call_operand.vmem [shape: f32[1,128], index: 2, kind: input, shape index: {}]
  %s3 = inlined_call_operand.hbm [shape: f32[8,128], index: 3, kind: output, shape index: {}]
  %s4 = sld [smem:[#allocation0]]
  $region34: #{tpu_custom_call.1} parent=0
    _
  %s6 = ssub.s32 1, %s4
  %s7 = scalar_select 0, %s6, %s4
  $region1: #{tpu_custom_call.1} parent=0
    #allocation3 [shape = 'u8[4096]{0}', space=vmem, size = 0x1000, scoped, tag = 'input window, operand 0, single buffered']
    #allocation4 [shape = 's32[1]{0}', space=sflag, size = 0x4, scoped, tag = 'scoped memory for tpu_custom_call.1']
    #allocation5 [shape = 's32[1]{0}', space=sflag, size = 0x4, scoped, tag = 'scoped memory for tpu_custom_call.1']
    #allocation6 [shape = 'u8[4096]{0}', space=vmem, size = 0x1000, scoped, tag = 'input window, operand 1, single buffered']
    #allocation7 [shape = 's32[1]{0}', space=sflag, size = 0x4, scoped, tag = 'scoped memory for tpu_custom_call.1']
    #allocation8 [shape = 'u8[4096]{0}', space=vmem, size = 0x1000, scoped, tag = 'output window, operand 0, single buffered']
    %8 = vsyncpa [#allocation4], 0
    %9 = vsyncpa [#allocation7], 0
    %10 = vsyncpa [#allocation5], 0
    // Predicated region
    $region2: #{tpu_custom_call.1} parent=1 // pred_check
      _
    $region3: #{tpu_custom_call.1} parent=1 // pred_check_branch
      %12 = sbr.rel (0) target = $region5
    $region4: #{tpu_custom_call.1} parent=1 // pred_region
      %14 = vsyncadd [#allocation4], 0
      %s16 = sshll.u32 %s0, 4
      %s17 = int_to_ptr.hbm [resolvable:$true] %s16
      %s18 = sshll.u32 [#allocation3], 4
      %s19 = int_to_ptr.vmem [resolvable:$true] %s18
      %21 = dma.hbm_to_vmem [thread:$0]  %s17, 128, %s19, [#allocation4]
    $region5: #{tpu_custom_call.1} parent=1 // pred_fallthru
      _
    // Predicated region
    $region6: #{tpu_custom_call.1} parent=1 // pred_check
      _
    $region7: #{tpu_custom_call.1} parent=1 // pred_check_branch
      %23 = sbr.rel (0) target = $region9
    $region8: #{tpu_custom_call.1} parent=1 // pred_region
      %25 = vsyncadd [#allocation7], 0
      %s27 = sshll.u32 %s1, 4
      %s28 = int_to_ptr.hbm [resolvable:$true] %s27
      %s29 = sshll.u32 [#allocation6], 4
      %s30 = int_to_ptr.vmem [resolvable:$true] %s29
      %32 = dma.hbm_to_vmem [thread:$0]  %s28, 128, %s30, [#allocation7]
    $region9: #{tpu_custom_call.1} parent=1 // pred_fallthru
      _
    // Predicated region
    $region10: #{tpu_custom_call.1} parent=1 // pred_check
      _
    $region11: #{tpu_custom_call.1} parent=1 // pred_check_branch
      %34 = sbr.rel (0) target = $region13
    $region12: #{tpu_custom_call.1} parent=1 // pred_region
      _
    $region13: #{tpu_custom_call.1} parent=1 // pred_fallthru
      _
    // Predicated region
    $region14: #{tpu_custom_call.1} parent=1 // pred_check
      _
    $region15: #{tpu_custom_call.1} parent=1 // pred_check_branch
      %36 = sbr.rel (0) target = $region17
    $region16: #{tpu_custom_call.1} parent=1 // pred_region
      %38 = dma.done [#allocation4], 128
    $region17: #{tpu_custom_call.1} parent=1 // pred_fallthru
      _
    // Predicated region
    $region18: #{tpu_custom_call.1} parent=1 // pred_check
      _
    $region19: #{tpu_custom_call.1} parent=1 // pred_check_branch
      %40 = sbr.rel (0) target = $region21
    $region20: #{tpu_custom_call.1} parent=1 // pred_region
      %42 = dma.done [#allocation7], 128
    $region21: #{tpu_custom_call.1} parent=1 // pred_fallthru
      _
    %p43 = scmp.eq.s32.totalorder 0, 0
    // Predicated region
    $region22: #{tpu_custom_call.1} parent=1 // pred_check
      %p44 = pneg %p43
    $region23: #{tpu_custom_call.1} parent=1 // pred_check_branch
      %46 = sbr.rel (%p44) target = $region25
    $region24: #{tpu_custom_call.1} parent=1 // pred_region
      %v47 = vld [vmem:[%s2] sm:$0x1]
      %48 = vst [vmem:[#allocation2] sm:$0x1] %v47
    $region25: #{tpu_custom_call.1} parent=1 // pred_fallthru
      _
    %v49 = vld [vmem:[#allocation3] sm:$0xff]
    %v50 = vld [vmem:[#allocation6] sm:$0xff]
    %v51 = vld [vmem:[#allocation2] sm:$0x1]
    %v52 = vsub.f32 %v50, %v51
    %v53 = vmul.f32 %v49, %v52
    %v54 = vadd.f32 %v51, %v53
    %v56 = vperm.slane %v54, 0
    %v58 = vsub.f32 %v50, %v56
    %v59 = vmul.f32 %v49, %v58
    %61 = vst [vmem:[#allocation1] sm:$0xff] %v59
    %s62 = scalar_lea.vmem [#allocation1], 1
    %v63 = vld [vmem:[%s62] ss:$9 sm:$0xff]
    %v65 = vadd.f32 %v54, %v63
    %v67 = vperm.slane %v65, 0
    %v69 = vsub.f32 %v50, %v67
    %v70 = vmul.f32 %v49, %v69
    %72 = vst [vmem:[#allocation1] sm:$0xff] %v70
    %s73 = scalar_lea.vmem [#allocation1], 2
    %v74 = vld [vmem:[%s73] ss:$9 sm:$0xff]
    %v76 = vadd.f32 %v65, %v74
    %v78 = vperm.slane %v76, 0
    %v80 = vsub.f32 %v50, %v78
    %v81 = vmul.f32 %v49, %v80
    %83 = vst [vmem:[#allocation1] sm:$0xff] %v81
    %s84 = scalar_lea.vmem [#allocation1], 3
    %v85 = vld [vmem:[%s84] ss:$9 sm:$0xff]
    %v87 = vadd.f32 %v76, %v85
    %v89 = vperm.slane %v87, 0
    %v91 = vsub.f32 %v50, %v89
    %v92 = vmul.f32 %v49, %v91
    %94 = vst [vmem:[#allocation1] sm:$0xff] %v92
    %s95 = scalar_lea.vmem [#allocation1], 4
    %v96 = vld [vmem:[%s95] ss:$9 sm:$0xff]
    %v98 = vadd.f32 %v87, %v96
    %v100 = vperm.slane %v98, 0
    %v102 = vsub.f32 %v50, %v100
    %v103 = vmul.f32 %v49, %v102
    %105 = vst [vmem:[#allocation1] sm:$0xff] %v103
    %s106 = scalar_lea.vmem [#allocation1], 5
    %v107 = vld [vmem:[%s106] ss:$9 sm:$0xff]
    %v109 = vadd.f32 %v98, %v107
    %v111 = vperm.slane %v109, 0
    %v113 = vsub.f32 %v50, %v111
    %v114 = vmul.f32 %v49, %v113
    %116 = vst [vmem:[#allocation1] sm:$0xff] %v114
    %s117 = scalar_lea.vmem [#allocation1], 6
    %v118 = vld [vmem:[%s117] ss:$9 sm:$0xff]
    %v120 = vadd.f32 %v109, %v118
    %v122 = vperm.slane %v120, 0
    %v124 = vsub.f32 %v50, %v122
    %v125 = vmul.f32 %v49, %v124
    %127 = vst [vmem:[#allocation1] sm:$0xff] %v125
    %s128 = scalar_lea.vmem [#allocation1], 7
    %v129 = vld [vmem:[%s128] ss:$9 sm:$0xff]
    %v131 = vadd.f32 %v120, %v129
    %v133 = vperm.slane %v131, 0
    %vm135 = vcmask 1040384
    %v136 = vsel %vm135, %v54, %v67
    %vm137 = vcmask 1041408
    %v138 = vsel %vm137, %v136, %v78
    %vm139 = vcmask 1042432
    %v140 = vsel %vm139, %v138, %v89
    %vm141 = vcmask 1043456
    %v142 = vsel %vm141, %v140, %v100
    %vm143 = vcmask 1044480
    %v144 = vsel %vm143, %v142, %v111
    %vm145 = vcmask 1045504
    %v146 = vsel %vm145, %v144, %v122
    %vm147 = vcmask 1046528
    %v148 = vsel %vm147, %v146, %v133
    %149 = vst [vmem:[#allocation8] sm:$0xff] %v148
    %150 = vst [vmem:[#allocation2] sm:$0x1] %v131
    // Predicated region
    $region26: #{tpu_custom_call.1} parent=1 // pred_check
      _
    $region27: #{tpu_custom_call.1} parent=1 // pred_check_branch
      %152 = sbr.rel (0) target = $region29
    $region28: #{tpu_custom_call.1} parent=1 // pred_region
      %154 = vsyncadd [#allocation5], 0
      %s156 = sshll.u32 [#allocation8], 4
      %s157 = int_to_ptr.vmem [resolvable:$true] %s156
      %s158 = sshll.u32 %s3, 4
      %s159 = int_to_ptr.hbm [resolvable:$true] %s158
      %161 = dma.vmem_to_hbm [thread:$0]  %s157, 128, %s159, [#allocation5]
    $region29: #{tpu_custom_call.1} parent=1 // pred_fallthru
      _
    // Predicated region
    $region30: #{tpu_custom_call.1} parent=1 // pred_check
      _
    $region31: #{tpu_custom_call.1} parent=1 // pred_check_branch
      %163 = sbr.rel (0) target = $region33
    $region32: #{tpu_custom_call.1} parent=1 // pred_region
      %165 = dma.done [#allocation5], 128
    $region33: #{tpu_custom_call.1} parent=1 // pred_fallthru
      _
    %166 = vsyncpa [#allocation4], 1
    %167 = vsyncpa [#allocation7], 1
    %168 = vsyncpa [#allocation5], 1

</llo_original>
